<compile_context>
chip_gen: v5e
topology: v5e:2x2
jax: 0.10.0
libtpu: 0.0.40
codegen_flags: <defaults>
</compile_context>

<pallas_src>
import jax
import jax.numpy as jnp
from jax.experimental import pallas as pl
from jax.experimental.pallas import tpu as pltpu

HIDDEN = 256


# ----------------------------------------------------------------------------
# Kernel
# ----------------------------------------------------------------------------
def critic_kernel(x_ref,
                  w1_ref, b1_ref,
                  w2a_ref, b2a_ref, w2b_ref, b2b_ref,
                  w3a_ref, w3b_ref, b3_ref,
                  q_ref):
    # bf16 MXU operands, f32 accumulation; bias + ReLU in f32.
    x = x_ref[...].astype(jnp.bfloat16)                       # (TB, obs+act)

    # ---- layer 1: both heads in ONE matmul (weights stacked to (in, 512)) ----
    z1 = jnp.dot(x, w1_ref[...], preferred_element_type=jnp.float32) + b1_ref[...]
    h1 = jnp.maximum(z1, 0.0).astype(jnp.bfloat16)            # (TB, 512)
    h1a = h1[:, :HIDDEN]                                      # lane-aligned slice
    h1b = h1[:, HIDDEN:]

    # ---- head A: layer 2 + layer 3 (w3a zero-padded to (256, 2), col 1 = 0) ----
    z2a = jnp.dot(h1a, w2a_ref[...], preferred_element_type=jnp.float32) + b2a_ref[...]
    h2a = jnp.maximum(z2a, 0.0).astype(jnp.bfloat16)
    q = jnp.dot(h2a, w3a_ref[...], preferred_element_type=jnp.float32)

    # ---- head B: layer 2 + layer 3 (w3b zero-padded to (256, 2), col 0 = 0) ----
    z2b = jnp.dot(h1b, w2b_ref[...], preferred_element_type=jnp.float32) + b2b_ref[...]
    h2b = jnp.maximum(z2b, 0.0).astype(jnp.bfloat16)
    q = q + jnp.dot(h2b, w3b_ref[...], preferred_element_type=jnp.float32)

    q_ref[...] = q + b3_ref[...]                              # (TB, 2) = [q1 | q2]


# ----------------------------------------------------------------------------
# Params
# ----------------------------------------------------------------------------
def init_linear(key, in_dim, out_dim):
    """Deterministic PyTorch-style (uniform +-1/sqrt(in)) linear init."""
    kw, kb = jax.random.split(key)
    bound = 1.0 / jnp.sqrt(jnp.float32(in_dim))
    w = jax.random.uniform(kw, (in_dim, out_dim), jnp.float32, -bound, bound)
    b = jax.random.uniform(kb, (1, out_dim), jnp.float32, -bound, bound)
    return w, b


def make_critic_params(key, observation_size, num_actions):
    in_dim = observation_size + num_actions
    keys = jax.random.split(key, 6)
    # Q1
    w1a, b1a = init_linear(keys[0], in_dim, HIDDEN)
    w2a, b2a = init_linear(keys[1], HIDDEN, HIDDEN)
    w3a, b3a = init_linear(keys[2], HIDDEN, 1)
    # Q2
    w1b, b1b = init_linear(keys[3], in_dim, HIDDEN)
    w2b, b2b = init_linear(keys[4], HIDDEN, HIDDEN)
    w3b, b3b = init_linear(keys[5], HIDDEN, 1)
    return (w1a, b1a, w2a, b2a, w3a, b3a,
            w1b, b1b, w2b, b2b, w3b, b3b)


def prepare_critic_params(params):
    """One-time (hoisted) conversion to kernel layout:
      * layer-1 weights of both heads stacked into (in_dim, 512) bf16,
      * layer-1 biases concatenated to (1, 512) f32,
      * layer-2 weights cast to bf16,
      * layer-3 weights zero-padded into (256, 2) bf16 slabs and the two
        biases concatenated to (1, 2) so the fused output is [q1 | q2]."""
    (w1a, b1a, w2a, b2a, w3a, b3a,
     w1b, b1b, w2b, b2b, w3b, b3b) = params
    bf16 = jnp.bfloat16

    w1 = jnp.concatenate([w1a, w1b], axis=1).astype(bf16)        # (in, 512)
    b1 = jnp.concatenate([b1a, b1b], axis=1)                     # (1, 512) f32

    zeros = jnp.zeros_like(w3a)
    w3a_p = jnp.concatenate([w3a, zeros], axis=1).astype(bf16)   # (256, 2), col 1 = 0
    w3b_p = jnp.concatenate([zeros, w3b], axis=1).astype(bf16)   # (256, 2), col 0 = 0
    b3 = jnp.concatenate([b3a, b3b], axis=1)                     # (1, 2) f32

    return (w1, b1,
            w2a.astype(bf16), b2a, w2b.astype(bf16), b2b,
            w3a_p, w3b_p, b3)


# ----------------------------------------------------------------------------
# Forward
# ----------------------------------------------------------------------------
def _choose_batch_tile(batch, batch_tile):
    """Pick a batch tile that (a) is a multiple of 8 (f32 sublane), (b) gives
    at least 2 grid steps when batch permits (v7x megacore sharding), and
    (c) prefers dividing the batch to avoid a ragged last tile."""
    if batch <= 8:
        return batch
    half = (batch + 1) // 2
    half = ((half + 7) // 8) * 8             # round up to multiple of 8
    tb = max(8, min(batch_tile, half))
    if batch % tb != 0:
        # Look for a multiple-of-8 divisor of batch, without shrinking > 2x.
        cand = tb
        while cand >= max(tb // 2, 8):
            if batch % cand == 0:
                tb = cand
                break
            cand -= 8
    return tb


def critic_forward(state, action, kparams, *, batch_tile=2048):
    """state: (B, obs), action: (B, act), kparams: prepare_critic_params(...).
    Returns (q1, q2), each (B, 1) f32."""
    state = state.astype(jnp.float32)
    action = action.astype(jnp.float32)

    # Single wrapper-side concat (negligible HBM traffic; kills the 4-way
    # layer-1 weight split inside the kernel).
    x = jnp.concatenate([state, action], axis=1)
    batch, in_dim = x.shape

    (w1, b1, w2a, b2a, w2b, b2b, w3a_p, w3b_p, b3) = kparams

    tb = _choose_batch_tile(batch, batch_tile)
    grid = (pl.cdiv(batch, tb),)

    def resident(arr):
        # Full weight/bias block, constant block index -> stays in VMEM
        # across grid steps.
        return pl.BlockSpec(arr.shape, lambda i: (0, 0))

    in_specs = [
        pl.BlockSpec((tb, in_dim), lambda i: (i, 0)),   # obs‖action tile
        resident(w1), resident(b1),
        resident(w2a), resident(b2a),
        resident(w2b), resident(b2b),
        resident(w3a_p), resident(w3b_p), resident(b3),
    ]

    q = pl.pallas_call(
        critic_kernel,
        out_shape=jax.ShapeDtypeStruct((batch, 2), jnp.float32),
        grid=grid,
        in_specs=in_specs,
        out_specs=pl.BlockSpec((tb, 2), lambda i: (i, 0)),
        compiler_params=pltpu.CompilerParams(
            dimension_semantics=("parallel",),
            vmem_limit_bytes=48 * 1024 * 1024),
    )(x, *kparams)

    return q[:, 0:1], q[:, 1:2]


# ----------------------------------------------------------------------------
# Pure-JAX reference
# ----------------------------------------------------------------------------
def critic_reference(state, action, params, operand_dtype=jnp.float32):
    """Reference forward. operand_dtype=jnp.bfloat16 mirrors the kernel's
    bf16-operand / f32-accumulate numerics exactly."""
    (w1a, b1a, w2a, b2a, w3a, b3a,
     w1b, b1b, w2b, b2b, w3b, b3b) = params
    x = jnp.concatenate([state, action], axis=1).astype(jnp.float32)

    def dot(a, w):
        return jnp.dot(a.astype(operand_dtype), w.astype(operand_dtype),
                       preferred_element_type=jnp.float32)

    def mlp(w1, b1, w2, b2, w3, b3):
        h1 = jnp.maximum(dot(x, w1) + b1, 0.0)
        h2 = jnp.maximum(dot(h1, w2) + b2, 0.0)
        return dot(h2, w3) + b3

    return (mlp(w1a, b1a, w2a, b2a, w3a, b3a),
            mlp(w1b, b1b, w2b, b2b, w3b, b3b))


def _check(q1, q2, state, action, params):
    # Tight check vs a reference mirroring the kernel's bf16/f32 numerics.
    q1_bf, q2_bf = critic_reference(state, action, params, jnp.bfloat16)
    assert jnp.allclose(q1, q1_bf, atol=2e-3, rtol=2e-3)
    assert jnp.allclose(q2, q2_bf, atol=2e-3, rtol=2e-3)
    # Loose semantic check vs the full-f32 PyTorch-equivalent forward.
    q1_f, q2_f = critic_reference(state, action, params, jnp.float32)
    assert jnp.allclose(q1, q1_f, atol=5e-2, rtol=5e-2)
    assert jnp.allclose(q2, q2_f, atol=5e-2, rtol=5e-2)


if __name__ == "__main__":
    observation_size = 16
    num_actions = 4

    key = jax.random.PRNGKey(0)
    k_param, k_s1, k_a1, k_s2, k_a2 = jax.random.split(key, 5)

    params = make_critic_params(k_param, observation_size, num_actions)
    # Hoisted, one-time weight prep (not in the per-call path).
    kparams = prepare_critic_params(params)

    # --- small-batch check (single tile) --------------------------------
    batch = 2
    state = jax.random.normal(k_s1, (batch, observation_size), jnp.float32)
    action = jax.random.normal(k_a1, (batch, num_actions), jnp.float32)

    fwd = jax.jit(critic_forward)
    q1, q2 = fwd(state, action, kparams)
    jax.block_until_ready((q1, q2))
    assert q1.shape == (batch, 1) and q2.shape == (batch, 1)
    _check(q1, q2, state, action, params)

    # --- multi-tile + ragged-last-tile check (grid of 3, last tile short) --
    batch2 = 20
    state2 = jax.random.normal(k_s2, (batch2, observation_size), jnp.float32)
    action2 = jax.random.normal(k_a2, (batch2, num_actions), jnp.float32)

    fwd_tiled = jax.jit(lambda s, a, p: critic_forward(s, a, p, batch_tile=8))
    q1b, q2b = fwd_tiled(state2, action2, kparams)
    jax.block_until_ready((q1b, q2b))
    assert q1b.shape == (batch2, 1) and q2b.shape == (batch2, 1)
    _check(q1b, q2b, state2, action2, params)

    print("KERNEL_OK")
</pallas_src>

<mosaic_0001>
module attributes {stable_mosaic.version = 11 : i64} {
  func.func @critic_kernel(%arg0: i32, %arg1: memref<2x20xf32, #tpu.memory_space<vmem>>, %arg2: memref<20x512xbf16, #tpu.memory_space<vmem>>, %arg3: memref<1x512xf32, #tpu.memory_space<vmem>>, %arg4: memref<256x256xbf16, #tpu.memory_space<vmem>>, %arg5: memref<1x256xf32, #tpu.memory_space<vmem>>, %arg6: memref<256x256xbf16, #tpu.memory_space<vmem>>, %arg7: memref<1x256xf32, #tpu.memory_space<vmem>>, %arg8: memref<256x2xbf16, #tpu.memory_space<vmem>>, %arg9: memref<256x2xbf16, #tpu.memory_space<vmem>>, %arg10: memref<1x2xf32, #tpu.memory_space<vmem>>, %arg11: memref<2x2xf32, #tpu.memory_space<vmem>>) attributes {dimension_semantics = [#tpu.dimension_semantics<parallel>], iteration_bounds = array<i64: 1>, scalar_prefetch = 0 : i64, scratch_operands = 0 : i64, tpu.core_type = #tpu.core_type<tc>, window_params = [{transform_indices = @transform_0, window_bounds = array<i64: 2, 20>}, {pipeline_mode = #tpu.pipeline_mode<synchronous>, transform_indices = @transform_1, window_bounds = array<i64: 20, 512>}, {pipeline_mode = #tpu.pipeline_mode<synchronous>, transform_indices = @transform_2, window_bounds = array<i64: 1, 512>}, {pipeline_mode = #tpu.pipeline_mode<synchronous>, transform_indices = @transform_3, window_bounds = array<i64: 256, 256>}, {pipeline_mode = #tpu.pipeline_mode<synchronous>, transform_indices = @transform_4, window_bounds = array<i64: 1, 256>}, {pipeline_mode = #tpu.pipeline_mode<synchronous>, transform_indices = @transform_5, window_bounds = array<i64: 256, 256>}, {pipeline_mode = #tpu.pipeline_mode<synchronous>, transform_indices = @transform_6, window_bounds = array<i64: 1, 256>}, {pipeline_mode = #tpu.pipeline_mode<synchronous>, transform_indices = @transform_7, window_bounds = array<i64: 256, 2>}, {pipeline_mode = #tpu.pipeline_mode<synchronous>, transform_indices = @transform_8, window_bounds = array<i64: 256, 2>}, {pipeline_mode = #tpu.pipeline_mode<synchronous>, transform_indices = @transform_9, window_bounds = array<i64: 1, 2>}, {transform_indices = @transform_10, window_bounds = array<i64: 2, 2>}]} {
    %c0 = arith.constant 0 : index
    %c0_0 = arith.constant 0 : index
    %0 = vector.load %arg1[%c0, %c0_0] : memref<2x20xf32, #tpu.memory_space<vmem>>, vector<2x20xf32>
    %1 = arith.truncf %0 : vector<2x20xf32> to vector<2x20xbf16>
    %c0_1 = arith.constant 0 : index
    %c0_2 = arith.constant 0 : index
    %2 = vector.load %arg2[%c0_1, %c0_2] : memref<20x512xbf16, #tpu.memory_space<vmem>>, vector<20x512xbf16>
    %cst = arith.constant dense<0.000000e+00> : vector<2x512xf32>
    %3 = tpu.matmul %1, %2, %cst {dimension_numbers = #tpu.dot_dimension_numbers<[1], [0], [0], [1], [0, 0, 1, 1], [], []>} : vector<2x20xbf16>, vector<20x512xbf16>, vector<2x512xf32> -> vector<2x512xf32>
    %c0_3 = arith.constant 0 : index
    %c0_4 = arith.constant 0 : index
    %4 = vector.load %arg3[%c0_3, %c0_4] : memref<1x512xf32, #tpu.memory_space<vmem>>, vector<1x512xf32>
    %5 = vector.broadcast %4 : vector<1x512xf32> to vector<2x512xf32>
    %6 = arith.addf %3, %5 : vector<2x512xf32>
    %cst_5 = arith.constant 0.000000e+00 : f32
    %7 = vector.broadcast %cst_5 : f32 to vector<2x512xf32>
    %8 = arith.maximumf %6, %7 : vector<2x512xf32>
    %9 = arith.truncf %8 : vector<2x512xf32> to vector<2x512xbf16>
    %10 = vector.extract_strided_slice %9 {offsets = [0, 0], sizes = [2, 256], strides = [1, 1]} : vector<2x512xbf16> to vector<2x256xbf16>
    %11 = vector.extract_strided_slice %9 {offsets = [0, 256], sizes = [2, 256], strides = [1, 1]} : vector<2x512xbf16> to vector<2x256xbf16>
    %c0_6 = arith.constant 0 : index
    %c0_7 = arith.constant 0 : index
    %12 = vector.load %arg4[%c0_6, %c0_7] : memref<256x256xbf16, #tpu.memory_space<vmem>>, vector<256x256xbf16>
    %cst_8 = arith.constant dense<0.000000e+00> : vector<2x256xf32>
    %13 = tpu.matmul %10, %12, %cst_8 {dimension_numbers = #tpu.dot_dimension_numbers<[1], [0], [0], [1], [0, 0, 1, 1], [], []>} : vector<2x256xbf16>, vector<256x256xbf16>, vector<2x256xf32> -> vector<2x256xf32>
    %c0_9 = arith.constant 0 : index
    %c0_10 = arith.constant 0 : index
    %14 = vector.load %arg5[%c0_9, %c0_10] : memref<1x256xf32, #tpu.memory_space<vmem>>, vector<1x256xf32>
    %15 = vector.broadcast %14 : vector<1x256xf32> to vector<2x256xf32>
    %16 = arith.addf %13, %15 : vector<2x256xf32>
    %cst_11 = arith.constant 0.000000e+00 : f32
    %17 = vector.broadcast %cst_11 : f32 to vector<2x256xf32>
    %18 = arith.maximumf %16, %17 : vector<2x256xf32>
    %19 = arith.truncf %18 : vector<2x256xf32> to vector<2x256xbf16>
    %c0_12 = arith.constant 0 : index
    %c0_13 = arith.constant 0 : index
    %20 = vector.load %arg8[%c0_12, %c0_13] : memref<256x2xbf16, #tpu.memory_space<vmem>>, vector<256x2xbf16>
    %cst_14 = arith.constant dense<0.000000e+00> : vector<2x2xf32>
    %21 = tpu.matmul %19, %20, %cst_14 {dimension_numbers = #tpu.dot_dimension_numbers<[1], [0], [0], [1], [0, 0, 1, 1], [], []>} : vector<2x256xbf16>, vector<256x2xbf16>, vector<2x2xf32> -> vector<2x2xf32>
    %c0_15 = arith.constant 0 : index
    %c0_16 = arith.constant 0 : index
    %22 = vector.load %arg6[%c0_15, %c0_16] : memref<256x256xbf16, #tpu.memory_space<vmem>>, vector<256x256xbf16>
    %cst_17 = arith.constant dense<0.000000e+00> : vector<2x256xf32>
    %23 = tpu.matmul %11, %22, %cst_17 {dimension_numbers = #tpu.dot_dimension_numbers<[1], [0], [0], [1], [0, 0, 1, 1], [], []>} : vector<2x256xbf16>, vector<256x256xbf16>, vector<2x256xf32> -> vector<2x256xf32>
    %c0_18 = arith.constant 0 : index
    %c0_19 = arith.constant 0 : index
    %24 = vector.load %arg7[%c0_18, %c0_19] : memref<1x256xf32, #tpu.memory_space<vmem>>, vector<1x256xf32>
    %25 = vector.broadcast %24 : vector<1x256xf32> to vector<2x256xf32>
    %26 = arith.addf %23, %25 : vector<2x256xf32>
    %cst_20 = arith.constant 0.000000e+00 : f32
    %27 = vector.broadcast %cst_20 : f32 to vector<2x256xf32>
    %28 = arith.maximumf %26, %27 : vector<2x256xf32>
    %29 = arith.truncf %28 : vector<2x256xf32> to vector<2x256xbf16>
    %c0_21 = arith.constant 0 : index
    %c0_22 = arith.constant 0 : index
    %30 = vector.load %arg9[%c0_21, %c0_22] : memref<256x2xbf16, #tpu.memory_space<vmem>>, vector<256x2xbf16>
    %cst_23 = arith.constant dense<0.000000e+00> : vector<2x2xf32>
    %31 = tpu.matmul %29, %30, %cst_23 {dimension_numbers = #tpu.dot_dimension_numbers<[1], [0], [0], [1], [0, 0, 1, 1], [], []>} : vector<2x256xbf16>, vector<256x2xbf16>, vector<2x2xf32> -> vector<2x2xf32>
    %32 = arith.addf %21, %31 : vector<2x2xf32>
    %c0_24 = arith.constant 0 : index
    %c0_25 = arith.constant 0 : index
    %33 = vector.load %arg10[%c0_24, %c0_25] : memref<1x2xf32, #tpu.memory_space<vmem>>, vector<1x2xf32>
    %34 = vector.broadcast %33 : vector<1x2xf32> to vector<2x2xf32>
    %35 = arith.addf %32, %34 : vector<2x2xf32>
    %c0_26 = arith.constant 0 : index
    %c0_27 = arith.constant 0 : index
    %36 = vector.load %arg11[%c0_26, %c0_27] : memref<2x2xf32, #tpu.memory_space<vmem>>, vector<2x2xf32>
    tpu.vector_store %arg11[%c0_26, %c0_27], %35 {strides = array<i32>} : memref<2x2xf32, #tpu.memory_space<vmem>>, vector<2x2xf32>,
    return
  }
  func.func @transform_0(%arg0: i32) -> (i32, i32) {
    %c0_i32 = arith.constant 0 : i32
    %c0_i32_0 = arith.constant 0 : i32
    return %arg0, %c0_i32 : i32, i32
  }
  func.func @transform_1(%arg0: i32) -> (i32, i32) {
    %c0_i32 = arith.constant 0 : i32
    %c0_i32_0 = arith.constant 0 : i32
    %c0_i32_1 = arith.constant 0 : i32
    return %c0_i32, %c0_i32_0 : i32, i32
  }
  func.func @transform_2(%arg0: i32) -> (i32, i32) {
    %c0_i32 = arith.constant 0 : i32
    %c0_i32_0 = arith.constant 0 : i32
    %c0_i32_1 = arith.constant 0 : i32
    return %c0_i32, %c0_i32_0 : i32, i32
  }
  func.func @transform_3(%arg0: i32) -> (i32, i32) {
    %c0_i32 = arith.constant 0 : i32
    %c0_i32_0 = arith.constant 0 : i32
    %c0_i32_1 = arith.constant 0 : i32
    return %c0_i32, %c0_i32_0 : i32, i32
  }
  func.func @transform_4(%arg0: i32) -> (i32, i32) {
    %c0_i32 = arith.constant 0 : i32
    %c0_i32_0 = arith.constant 0 : i32
    %c0_i32_1 = arith.constant 0 : i32
    return %c0_i32, %c0_i32_0 : i32, i32
  }
  func.func @transform_5(%arg0: i32) -> (i32, i32) {
    %c0_i32 = arith.constant 0 : i32
    %c0_i32_0 = arith.constant 0 : i32
    %c0_i32_1 = arith.constant 0 : i32
    return %c0_i32, %c0_i32_0 : i32, i32
  }
  func.func @transform_6(%arg0: i32) -> (i32, i32) {
    %c0_i32 = arith.constant 0 : i32
    %c0_i32_0 = arith.constant 0 : i32
    %c0_i32_1 = arith.constant 0 : i32
    return %c0_i32, %c0_i32_0 : i32, i32
  }
  func.func @transform_7(%arg0: i32) -> (i32, i32) {
    %c0_i32 = arith.constant 0 : i32
    %c0_i32_0 = arith.constant 0 : i32
    %c0_i32_1 = arith.constant 0 : i32
    return %c0_i32, %c0_i32_0 : i32, i32
  }
  func.func @transform_8(%arg0: i32) -> (i32, i32) {
    %c0_i32 = arith.constant 0 : i32
    %c0_i32_0 = arith.constant 0 : i32
    %c0_i32_1 = arith.constant 0 : i32
    return %c0_i32, %c0_i32_0 : i32, i32
  }
  func.func @transform_9(%arg0: i32) -> (i32, i32) {
    %c0_i32 = arith.constant 0 : i32
    %c0_i32_0 = arith.constant 0 : i32
    %c0_i32_1 = arith.constant 0 : i32
    return %c0_i32, %c0_i32_0 : i32, i32
  }
  func.func @transform_10(%arg0: i32) -> (i32, i32) {
    %c0_i32 = arith.constant 0 : i32
    %c0_i32_0 = arith.constant 0 : i32
    return %arg0, %c0_i32 : i32, i32
  }
}

</mosaic_0001>

<llo_original>
// kernel: critic_forward.1
$region0: #{critic_forward.1}
  #allocation0 [shape = 'u32[]', space=smem, size = 0x4, offset = 0x4, fixed_abs, tag = 'smem constant byte address 0x4 - core index']
  #allocation1 [shape = 'u32[72,128]{1,0:T(1,128)}', space=vmem, size = 0x9000, scoped, tag = 'internal scratch']
  %s0 = inlined_call_operand.vmem [shape: f32[2,20], index: 0, kind: input, shape index: {}]
  %s1 = inlined_call_operand.hbm [shape: bf16[20,512], index: 1, kind: input, shape index: {}]
  %s2 = inlined_call_operand.vmem [shape: f32[1,512], index: 2, kind: input, shape index: {}]
  %s3 = inlined_call_operand.vmem [shape: bf16[256,256], index: 3, kind: input, shape index: {}]
  %s4 = inlined_call_operand.vmem [shape: f32[1,256], index: 4, kind: input, shape index: {}]
  %s5 = inlined_call_operand.hbm [shape: bf16[256,256], index: 5, kind: input, shape index: {}]
  %s6 = inlined_call_operand.vmem [shape: f32[1,256], index: 6, kind: input, shape index: {}]
  %s7 = inlined_call_operand.vmem [shape: bf16[256,2], index: 7, kind: input, shape index: {}]
  %s8 = inlined_call_operand.vmem [shape: bf16[256,2], index: 8, kind: input, shape index: {}]
  %s9 = inlined_call_operand.vmem [shape: f32[1,2], index: 9, kind: input, shape index: {}]
  %s10 = inlined_call_operand.vmem [shape: f32[2,2], index: 10, kind: output, shape index: {}]
  %s11 = sld [smem:[#allocation0]]
  $region58: #{critic_forward.1} parent=0
    _
  %s13 = ssub.s32 1, %s11
  %s14 = scalar_select 0, %s13, %s11
  $region1: #{critic_forward.1} parent=0
    #allocation2 [shape = 'u8[24576]{0}', space=vmem, size = 0x6000, scoped, tag = 'input window, operand 1, single buffered']
    #allocation3 [shape = 's32[1]{0}', space=sflag, size = 0x4, scoped, tag = 'scoped memory for critic_forward.1']
    #allocation4 [shape = 'u8[131072]{0}', space=vmem, size = 0x20000, scoped, tag = 'input window, operand 5, single buffered']
    #allocation5 [shape = 's32[1]{0}', space=sflag, size = 0x4, scoped, tag = 'scoped memory for critic_forward.1']
    %15 = vsyncpa [#allocation3], 0
    %16 = vsyncpa [#allocation5], 0
    // Predicated region
    $region2: #{critic_forward.1} parent=1 // pred_check
      _
    $region3: #{critic_forward.1} parent=1 // pred_check_branch
      %18 = sbr.rel (0) target = $region5
    $region4: #{critic_forward.1} parent=1 // pred_region
      _
    $region5: #{critic_forward.1} parent=1 // pred_fallthru
      _
    // Predicated region
    $region6: #{critic_forward.1} parent=1 // pred_check
      _
    $region7: #{critic_forward.1} parent=1 // pred_check_branch
      %20 = sbr.rel (0) target = $region9
    $region8: #{critic_forward.1} parent=1 // pred_region
      %22 = vsyncadd [#allocation3], 0
      %s23 = sshll.u32 %s1, 4
      %s24 = int_to_ptr.hbm [resolvable:$true] %s23
      %s25 = sshll.u32 [#allocation2], 4
      %s26 = int_to_ptr.vmem [resolvable:$true] %s25
      %31 = dma.hbm_to_vmem [thread:$0]  %s24, 768, %s26, [#allocation3], 256, 256, 16
    $region9: #{critic_forward.1} parent=1 // pred_fallthru
      _
    // Predicated region
    $region10: #{critic_forward.1} parent=1 // pred_check
      _
    $region11: #{critic_forward.1} parent=1 // pred_check_branch
      %33 = sbr.rel (0) target = $region13
    $region12: #{critic_forward.1} parent=1 // pred_region
      _
    $region13: #{critic_forward.1} parent=1 // pred_fallthru
      _
    // Predicated region
    $region14: #{critic_forward.1} parent=1 // pred_check
      _
    $region15: #{critic_forward.1} parent=1 // pred_check_branch
      %35 = sbr.rel (0) target = $region17
    $region16: #{critic_forward.1} parent=1 // pred_region
      _
    $region17: #{critic_forward.1} parent=1 // pred_fallthru
      _
    // Predicated region
    $region18: #{critic_forward.1} parent=1 // pred_check
      _
    $region19: #{critic_forward.1} parent=1 // pred_check_branch
      %37 = sbr.rel (0) target = $region21
    $region20: #{critic_forward.1} parent=1 // pred_region
      _
    $region21: #{critic_forward.1} parent=1 // pred_fallthru
      _
    // Predicated region
    $region22: #{critic_forward.1} parent=1 // pred_check
      _
    $region23: #{critic_forward.1} parent=1 // pred_check_branch
      %39 = sbr.rel (0) target = $region25
    $region24: #{critic_forward.1} parent=1 // pred_region
      %41 = vsyncadd [#allocation5], 0
      %s42 = sshll.u32 %s5, 4
      %s43 = int_to_ptr.hbm [resolvable:$true] %s42
      %s44 = sshll.u32 [#allocation4], 4
      %s45 = int_to_ptr.vmem [resolvable:$true] %s44
      %50 = dma.hbm_to_vmem [thread:$0]  %s43, 4096, %s45, [#allocation5], 128, 128, 8
    $region25: #{critic_forward.1} parent=1 // pred_fallthru
      _
    // Predicated region
    $region26: #{critic_forward.1} parent=1 // pred_check
      _
    $region27: #{critic_forward.1} parent=1 // pred_check_branch
      %52 = sbr.rel (0) target = $region29
    $region28: #{critic_forward.1} parent=1 // pred_region
      _
    $region29: #{critic_forward.1} parent=1 // pred_fallthru
      _
    // Predicated region
    $region30: #{critic_forward.1} parent=1 // pred_check
      _
    $region31: #{critic_forward.1} parent=1 // pred_check_branch
      %54 = sbr.rel (0) target = $region33
    $region32: #{critic_forward.1} parent=1 // pred_region
      _
    $region33: #{critic_forward.1} parent=1 // pred_fallthru
      _
    // Predicated region
    $region34: #{critic_forward.1} parent=1 // pred_check
      _
    $region35: #{critic_forward.1} parent=1 // pred_check_branch
      %56 = sbr.rel (0) target = $region37
    $region36: #{critic_forward.1} parent=1 // pred_region
      _
    $region37: #{critic_forward.1} parent=1 // pred_fallthru
      _
    // Predicated region
    $region38: #{critic_forward.1} parent=1 // pred_check
      _
    $region39: #{critic_forward.1} parent=1 // pred_check_branch
      %58 = sbr.rel (0) target = $region41
    $region40: #{critic_forward.1} parent=1 // pred_region
      _
    $region41: #{critic_forward.1} parent=1 // pred_fallthru
      _
    // Predicated region
    $region42: #{critic_forward.1} parent=1 // pred_check
      _
    $region43: #{critic_forward.1} parent=1 // pred_check_branch
      %60 = sbr.rel (0) target = $region45
    $region44: #{critic_forward.1} parent=1 // pred_region
      %62 = dma.done [#allocation3], 768
    $region45: #{critic_forward.1} parent=1 // pred_fallthru
      _
    // Predicated region
    $region46: #{critic_forward.1} parent=1 // pred_check
      _
    $region47: #{critic_forward.1} parent=1 // pred_check_branch
      %64 = sbr.rel (0) target = $region49
    $region48: #{critic_forward.1} parent=1 // pred_region
      %66 = dma.done [#allocation5], 4096
    $region49: #{critic_forward.1} parent=1 // pred_fallthru
      _
    %v68 = vld [vmem:[%s0] sm:$0x3]
    %v69 = vpack.c.bf16 %v68, %v68
    %v70 = vld [vmem:[#allocation2] sm:$0xff]
    %v71 = vld [vmem:[#allocation2 + $0x8] sm:$0xff]
    %v72 = vld [vmem:[#allocation2 + $0x10] sm:$0xff]
    %v73 = vld [vmem:[#allocation2 + $0x18] sm:$0xff]
    %v74 = vld [vmem:[#allocation2 + $0x20] sm:$0x33]
    %v75 = vld [vmem:[#allocation2 + $0x28] sm:$0x33]
    %v76 = vld [vmem:[%s2] sm:$0xf]
    %v78 = vperm.slane %v76, 0
    %v79 = vperm.slane %v76, 1
    %v80 = vperm.slane %v76, 2
    %v81 = vperm.slane %v76, 3
    %v92 = vunpack.c.l.b16 %v70
    %v93 = vunpack.c.h.b16 %v70
    %v94 = vunpack.c.l.b16 %v71
    %v95 = vunpack.c.h.b16 %v71
    %v96 = vunpack.c.l.b16 %v72
    %v97 = vunpack.c.h.b16 %v72
    %v98 = vunpack.c.l.b16 %v73
    %v99 = vunpack.c.h.b16 %v73
    %v100 = vunpack.c.l.b16 %v74
    %v101 = vunpack.c.h.b16 %v74
    %v102 = vunpack.c.l.b16 %v75
    %v103 = vunpack.c.h.b16 %v75
    %v104 = vpack.c.b16 %v96, %v92
    %v105 = vpack.c.b16 %v97, %v93
    %v106 = vpack.c.b16 %v98, %v94
    %v107 = vpack.c.b16 %v99, %v95
    %v108 = vpack.c.b16 %v100, %v100
    %v109 = vpack.c.b16 %v101, %v101
    %v110 = vpack.c.b16 %v102, %v102
    %v111 = vpack.c.b16 %v103, %v103
    %vm116 = vcmask 162816
    %v118 = vsel %vm116, %v69, 0
    %vm120 = vcmask 1041408
    %v122 = vsel %vm120, %v108, 0
    %v125 = vsel %vm120, %v109, 0
    %v128 = vsel %vm120, %v110, 0
    %v131 = vsel %vm120, %v111, 0
    %133 = vmatpush.bf16.msra.mxu0 0
    %134 = vmatpush.bf16.msra.mxu0 0
    %135 = vmatpush.bf16.msra.mxu0 0
    %136 = vmatpush.bf16.msra.mxu0 0
    %137 = vmatpush.bf16.msra.mxu0 0
    %138 = vmatpush.bf16.msra.mxu0 0
    %139 = vmatpush.bf16.msra.mxu0 %v122
    %140 = vmatpush.bf16.msra.mxu0 %v104
    %141 = vmatmul.bf16.gmra.mxu0 %v118
    %v142 = vpop.f32.mrf.mxu0
    %v143 = vadd.f32 %v78, %v142
    %v144 = vpop.f32.mrf.mxu0
    %145 = vdwg.mxu0
    %146 = vmatpush.bf16.msra.mxu0 0
    %147 = vmatpush.bf16.msra.mxu0 0
    %148 = vmatpush.bf16.msra.mxu0 0
    %149 = vmatpush.bf16.msra.mxu0 0
    %150 = vmatpush.bf16.msra.mxu0 0
    %151 = vmatpush.bf16.msra.mxu0 0
    %152 = vmatpush.bf16.msra.mxu0 %v125
    %153 = vmatpush.bf16.msra.mxu0 %v105
    %154 = vmatmul.bf16.gmra.mxu0 %v118
    %v155 = vpop.f32.mrf.mxu0
    %v156 = vadd.f32 %v79, %v155
    %v157 = vpop.f32.mrf.mxu0
    %158 = vdwg.mxu0
    %159 = vmatpush.bf16.msra.mxu0 0
    %160 = vmatpush.bf16.msra.mxu0 0
    %161 = vmatpush.bf16.msra.mxu0 0
    %162 = vmatpush.bf16.msra.mxu0 0
    %163 = vmatpush.bf16.msra.mxu0 0
    %164 = vmatpush.bf16.msra.mxu0 0
    %165 = vmatpush.bf16.msra.mxu0 %v128
    %166 = vmatpush.bf16.msra.mxu0 %v106
    %167 = vmatmul.bf16.gmra.mxu0 %v118
    %v168 = vpop.f32.mrf.mxu0
    %v169 = vadd.f32 %v80, %v168
    %v170 = vpop.f32.mrf.mxu0
    %171 = vdwg.mxu0
    %172 = vmatpush.bf16.msra.mxu0 0
    %173 = vmatpush.bf16.msra.mxu0 0
    %174 = vmatpush.bf16.msra.mxu0 0
    %175 = vmatpush.bf16.msra.mxu0 0
    %176 = vmatpush.bf16.msra.mxu0 0
    %177 = vmatpush.bf16.msra.mxu0 0
    %178 = vmatpush.bf16.msra.mxu0 %v131
    %179 = vmatpush.bf16.msra.mxu0 %v107
    %180 = vmatmul.bf16.gmra.mxu0 %v118
    %v181 = vpop.f32.mrf.mxu0
    %v182 = vadd.f32 %v81, %v181
    %v183 = vpop.f32.mrf.mxu0
    %184 = vdwg.mxu0
    %v185 = vmax.f32 %v143, 0.0
    %v186 = vmax.f32 %v156, 0.0
    %v187 = vmax.f32 %v169, 0.0
    %v188 = vmax.f32 %v182, 0.0
    %v189 = vpack.c.bf16 %v186, %v185
    %v190 = vpack.c.bf16 %v188, %v187
    %v191 = vld [vmem:[%s3] sm:$0xff]
    %v192 = vld [vmem:[%s3 + $0x8] sm:$0xff]
    %v193 = vld [vmem:[%s3 + $0x10] sm:$0xff]
    %v194 = vld [vmem:[%s3 + $0x18] sm:$0xff]
    %v195 = vld [vmem:[%s3 + $0x20] sm:$0xff]
    %v196 = vld [vmem:[%s3 + $0x28] sm:$0xff]
    %v197 = vld [vmem:[%s3 + $0x30] sm:$0xff]
    %v198 = vld [vmem:[%s3 + $0x38] sm:$0xff]
    %v199 = vld [vmem:[%s3 + $0x40] sm:$0xff]
    %v200 = vld [vmem:[%s3 + $0x48] sm:$0xff]
    %v201 = vld [vmem:[%s3 + $0x50] sm:$0xff]
    %v202 = vld [vmem:[%s3 + $0x58] sm:$0xff]
    %v203 = vld [vmem:[%s3 + $0x60] sm:$0xff]
    %v204 = vld [vmem:[%s3 + $0x68] sm:$0xff]
    %v205 = vld [vmem:[%s3 + $0x70] sm:$0xff]
    %v206 = vld [vmem:[%s3 + $0x78] sm:$0xff]
    %v207 = vld [vmem:[%s3 + $0x80] sm:$0xff]
    %v208 = vld [vmem:[%s3 + $0x88] sm:$0xff]
    %v209 = vld [vmem:[%s3 + $0x90] sm:$0xff]
    %v210 = vld [vmem:[%s3 + $0x98] sm:$0xff]
    %v211 = vld [vmem:[%s3 + $0xa0] sm:$0xff]
    %v212 = vld [vmem:[%s3 + $0xa8] sm:$0xff]
    %v213 = vld [vmem:[%s3 + $0xb0] sm:$0xff]
    %v214 = vld [vmem:[%s3 + $0xb8] sm:$0xff]
    %v215 = vld [vmem:[%s3 + $0xc0] sm:$0xff]
    %v216 = vld [vmem:[%s3 + $0xc8] sm:$0xff]
    %v217 = vld [vmem:[%s3 + $0xd0] sm:$0xff]
    %v218 = vld [vmem:[%s3 + $0xd8] sm:$0xff]
    %v219 = vld [vmem:[%s3 + $0xe0] sm:$0xff]
    %v220 = vld [vmem:[%s3 + $0xe8] sm:$0xff]
    %v221 = vld [vmem:[%s3 + $0xf0] sm:$0xff]
    %v222 = vld [vmem:[%s3 + $0xf8] sm:$0xff]
    %v223 = vld [vmem:[%s4] sm:$0x3]
    %v225 = vperm.slane %v223, 0
    %v226 = vperm.slane %v223, 1
    %v230 = vunpack.c.l.b16 %v189
    %v231 = vunpack.c.h.b16 %v189
    %v232 = vpack.c.b16 %v230, %v230
    %v233 = vpack.c.b16 %v231, %v231
    %v268 = vunpack.c.l.b16 %v191
    %v269 = vunpack.c.h.b16 %v191
    %v270 = vunpack.c.l.b16 %v192
    %v271 = vunpack.c.h.b16 %v192
    %v272 = vunpack.c.l.b16 %v193
    %v273 = vunpack.c.h.b16 %v193
    %v274 = vunpack.c.l.b16 %v194
    %v275 = vunpack.c.h.b16 %v194
    %v276 = vunpack.c.l.b16 %v195
    %v277 = vunpack.c.h.b16 %v195
    %v278 = vunpack.c.l.b16 %v196
    %v279 = vunpack.c.h.b16 %v196
    %v280 = vunpack.c.l.b16 %v197
    %v281 = vunpack.c.h.b16 %v197
    %v282 = vunpack.c.l.b16 %v198
    %v283 = vunpack.c.h.b16 %v198
    %v284 = vunpack.c.l.b16 %v199
    %v285 = vunpack.c.h.b16 %v199
    %v286 = vunpack.c.l.b16 %v200
    %v287 = vunpack.c.h.b16 %v200
    %v288 = vunpack.c.l.b16 %v201
    %v289 = vunpack.c.h.b16 %v201
    %v290 = vunpack.c.l.b16 %v202
    %v291 = vunpack.c.h.b16 %v202
    %v292 = vunpack.c.l.b16 %v203
    %v293 = vunpack.c.h.b16 %v203
    %v294 = vunpack.c.l.b16 %v204
    %v295 = vunpack.c.h.b16 %v204
    %v296 = vunpack.c.l.b16 %v205
    %v297 = vunpack.c.h.b16 %v205
    %v298 = vunpack.c.l.b16 %v206
    %v299 = vunpack.c.h.b16 %v206
    %v300 = vunpack.c.l.b16 %v207
    %v301 = vunpack.c.h.b16 %v207
    %v302 = vunpack.c.l.b16 %v208
    %v303 = vunpack.c.h.b16 %v208
    %v304 = vunpack.c.l.b16 %v209
    %v305 = vunpack.c.h.b16 %v209
    %v306 = vunpack.c.l.b16 %v210
    %v307 = vunpack.c.h.b16 %v210
    %v308 = vunpack.c.l.b16 %v211
    %v309 = vunpack.c.h.b16 %v211
    %v310 = vunpack.c.l.b16 %v212
    %v311 = vunpack.c.h.b16 %v212
    %v312 = vunpack.c.l.b16 %v213
    %v313 = vunpack.c.h.b16 %v213
    %v314 = vunpack.c.l.b16 %v214
    %v315 = vunpack.c.h.b16 %v214
    %v316 = vunpack.c.l.b16 %v215
    %v317 = vunpack.c.h.b16 %v215
    %v318 = vunpack.c.l.b16 %v216
    %v319 = vunpack.c.h.b16 %v216
    %v320 = vunpack.c.l.b16 %v217
    %v321 = vunpack.c.h.b16 %v217
    %v322 = vunpack.c.l.b16 %v218
    %v323 = vunpack.c.h.b16 %v218
    %v324 = vunpack.c.l.b16 %v219
    %v325 = vunpack.c.h.b16 %v219
    %v326 = vunpack.c.l.b16 %v220
    %v327 = vunpack.c.h.b16 %v220
    %v328 = vunpack.c.l.b16 %v221
    %v329 = vunpack.c.h.b16 %v221
    %v330 = vunpack.c.l.b16 %v222
    %v331 = vunpack.c.h.b16 %v222
    %v332 = vpack.c.b16 %v270, %v268
    %v333 = vpack.c.b16 %v271, %v269
    %v334 = vpack.c.b16 %v274, %v272
    %v335 = vpack.c.b16 %v275, %v273
    %v336 = vpack.c.b16 %v278, %v276
    %v337 = vpack.c.b16 %v279, %v277
    %v338 = vpack.c.b16 %v282, %v280
    %v339 = vpack.c.b16 %v283, %v281
    %v340 = vpack.c.b16 %v286, %v284
    %v341 = vpack.c.b16 %v287, %v285
    %v342 = vpack.c.b16 %v290, %v288
    %v343 = vpack.c.b16 %v291, %v289
    %v344 = vpack.c.b16 %v294, %v292
    %v345 = vpack.c.b16 %v295, %v293
    %v346 = vpack.c.b16 %v298, %v296
    %v347 = vpack.c.b16 %v299, %v297
    %v348 = vpack.c.b16 %v302, %v300
    %v349 = vpack.c.b16 %v303, %v301
    %v350 = vpack.c.b16 %v306, %v304
    %v351 = vpack.c.b16 %v307, %v305
    %v352 = vpack.c.b16 %v310, %v308
    %v353 = vpack.c.b16 %v311, %v309
    %v354 = vpack.c.b16 %v314, %v312
    %v355 = vpack.c.b16 %v315, %v313
    %v356 = vpack.c.b16 %v318, %v316
    %v357 = vpack.c.b16 %v319, %v317
    %v358 = vpack.c.b16 %v322, %v320
    %v359 = vpack.c.b16 %v323, %v321
    %v360 = vpack.c.b16 %v326, %v324
    %v361 = vpack.c.b16 %v327, %v325
    %v362 = vpack.c.b16 %v330, %v328
    %v363 = vpack.c.b16 %v331, %v329
    %396 = vmatpush.bf16.msra.mxu0 %v346
    %397 = vmatpush.bf16.msra.mxu0 %v344
    %398 = vmatpush.bf16.msra.mxu0 %v342
    %399 = vmatpush.bf16.msra.mxu0 %v340
    %400 = vmatpush.bf16.msra.mxu0 %v338
    %401 = vmatpush.bf16.msra.mxu0 %v336
    %402 = vmatpush.bf16.msra.mxu0 %v334
    %403 = vmatpush.bf16.msra.mxu0 %v332
    %404 = vmatmul.bf16.gmra.mxu0 %v232
    %v405 = vpop.f32.mrf.mxu0
    %v406 = vadd.f32 %v225, %v405
    %v407 = vpop.f32.mrf.mxu0
    %408 = vdwg.mxu0
    %409 = vmatpush.bf16.msra.mxu0 %v362
    %410 = vmatpush.bf16.msra.mxu0 %v360
    %411 = vmatpush.bf16.msra.mxu0 %v358
    %412 = vmatpush.bf16.msra.mxu0 %v356
    %413 = vmatpush.bf16.msra.mxu0 %v354
    %414 = vmatpush.bf16.msra.mxu0 %v352
    %415 = vmatpush.bf16.msra.mxu0 %v350
    %416 = vmatpush.bf16.msra.mxu0 %v348
    %417 = vmatmul.bf16.gmra.mxu0 %v233
    %v418 = vpop.f32.mrf.mxu0
    %v419 = vadd.f32 %v406, %v418
    %v420 = vpop.f32.mrf.mxu0
    %421 = vdwg.mxu0
    %422 = vmatpush.bf16.msra.mxu0 %v347
    %423 = vmatpush.bf16.msra.mxu0 %v345
    %424 = vmatpush.bf16.msra.mxu0 %v343
    %425 = vmatpush.bf16.msra.mxu0 %v341
    %426 = vmatpush.bf16.msra.mxu0 %v339
    %427 = vmatpush.bf16.msra.mxu0 %v337
    %428 = vmatpush.bf16.msra.mxu0 %v335
    %429 = vmatpush.bf16.msra.mxu0 %v333
    %430 = vmatmul.bf16.gmra.mxu0 %v232
    %v431 = vpop.f32.mrf.mxu0
    %v432 = vadd.f32 %v226, %v431
    %v433 = vpop.f32.mrf.mxu0
    %434 = vdwg.mxu0
    %435 = vmatpush.bf16.msra.mxu0 %v363
    %436 = vmatpush.bf16.msra.mxu0 %v361
    %437 = vmatpush.bf16.msra.mxu0 %v359
    %438 = vmatpush.bf16.msra.mxu0 %v357
    %439 = vmatpush.bf16.msra.mxu0 %v355
    %440 = vmatpush.bf16.msra.mxu0 %v353
    %441 = vmatpush.bf16.msra.mxu0 %v351
    %442 = vmatpush.bf16.msra.mxu0 %v349
    %443 = vmatmul.bf16.gmra.mxu0 %v233
    %v444 = vpop.f32.mrf.mxu0
    %v445 = vadd.f32 %v432, %v444
    %v446 = vpop.f32.mrf.mxu0
    %447 = vdwg.mxu0
    %v448 = vmax.f32 %v419, 0.0
    %v449 = vmax.f32 %v445, 0.0
    %v450 = vpack.c.bf16 %v448, %v448
    %v451 = vpack.c.bf16 %v449, %v449
    %v452 = vld [vmem:[%s7] sm:$0xf]
    %v453 = vld [vmem:[%s7 + $0x4] sm:$0xf]
    %v454 = vld [vmem:[%s7 + $0x8] sm:$0xf]
    %v455 = vld [vmem:[%s7 + $0xc] sm:$0xf]
    %v456 = vld [vmem:[%s7 + $0x10] sm:$0xf]
    %v457 = vld [vmem:[%s7 + $0x14] sm:$0xf]
    %v458 = vld [vmem:[%s7 + $0x18] sm:$0xf]
    %v459 = vld [vmem:[%s7 + $0x1c] sm:$0xf]
    %v460 = vld [vmem:[%s7 + $0x20] sm:$0xf]
    %v461 = vld [vmem:[%s7 + $0x24] sm:$0xf]
    %v462 = vld [vmem:[%s7 + $0x28] sm:$0xf]
    %v463 = vld [vmem:[%s7 + $0x2c] sm:$0xf]
    %v464 = vld [vmem:[%s7 + $0x30] sm:$0xf]
    %v465 = vld [vmem:[%s7 + $0x34] sm:$0xf]
    %v466 = vld [vmem:[%s7 + $0x38] sm:$0xf]
    %v467 = vld [vmem:[%s7 + $0x3c] sm:$0xf]
    %v468 = vld [vmem:[%s7 + $0x40] sm:$0xf]
    %v469 = vld [vmem:[%s7 + $0x44] sm:$0xf]
    %v470 = vld [vmem:[%s7 + $0x48] sm:$0xf]
    %v471 = vld [vmem:[%s7 + $0x4c] sm:$0xf]
    %v472 = vld [vmem:[%s7 + $0x50] sm:$0xf]
    %v473 = vld [vmem:[%s7 + $0x54] sm:$0xf]
    %v474 = vld [vmem:[%s7 + $0x58] sm:$0xf]
    %v475 = vld [vmem:[%s7 + $0x5c] sm:$0xf]
    %v476 = vld [vmem:[%s7 + $0x60] sm:$0xf]
    %v477 = vld [vmem:[%s7 + $0x64] sm:$0xf]
    %v478 = vld [vmem:[%s7 + $0x68] sm:$0xf]
    %v479 = vld [vmem:[%s7 + $0x6c] sm:$0xf]
    %v480 = vld [vmem:[%s7 + $0x70] sm:$0xf]
    %v481 = vld [vmem:[%s7 + $0x74] sm:$0xf]
    %v482 = vld [vmem:[%s7 + $0x78] sm:$0xf]
    %v483 = vld [vmem:[%s7 + $0x7c] sm:$0xf]
    %v484 = vld [vmem:[#allocation4] sm:$0xff]
    %v485 = vld [vmem:[#allocation4 + $0x8] sm:$0xff]
    %v486 = vld [vmem:[#allocation4 + $0x10] sm:$0xff]
    %v487 = vld [vmem:[#allocation4 + $0x18] sm:$0xff]
    %v488 = vld [vmem:[#allocation4 + $0x20] sm:$0xff]
    %v489 = vld [vmem:[#allocation4 + $0x28] sm:$0xff]
    %v490 = vld [vmem:[#allocation4 + $0x30] sm:$0xff]
    %v491 = vld [vmem:[#allocation4 + $0x38] sm:$0xff]
    %v492 = vld [vmem:[#allocation4 + $0x40] sm:$0xff]
    %v493 = vld [vmem:[#allocation4 + $0x48] sm:$0xff]
    %v494 = vld [vmem:[#allocation4 + $0x50] sm:$0xff]
    %v495 = vld [vmem:[#allocation4 + $0x58] sm:$0xff]
    %v496 = vld [vmem:[#allocation4 + $0x60] sm:$0xff]
    %v497 = vld [vmem:[#allocation4 + $0x68] sm:$0xff]
    %v498 = vld [vmem:[#allocation4 + $0x70] sm:$0xff]
    %v499 = vld [vmem:[#allocation4 + $0x78] sm:$0xff]
    %v500 = vld [vmem:[#allocation4 + $0x80] sm:$0xff]
    %v501 = vld [vmem:[#allocation4 + $0x88] sm:$0xff]
    %v502 = vld [vmem:[#allocation4 + $0x90] sm:$0xff]
    %v503 = vld [vmem:[#allocation4 + $0x98] sm:$0xff]
    %v504 = vld [vmem:[#allocation4 + $0xa0] sm:$0xff]
    %v505 = vld [vmem:[#allocation4 + $0xa8] sm:$0xff]
    %v506 = vld [vmem:[#allocation4 + $0xb0] sm:$0xff]
    %v507 = vld [vmem:[#allocation4 + $0xb8] sm:$0xff]
    %v508 = vld [vmem:[#allocation4 + $0xc0] sm:$0xff]
    %v509 = vld [vmem:[#allocation4 + $0xc8] sm:$0xff]
    %v510 = vld [vmem:[#allocation4 + $0xd0] sm:$0xff]
    %v511 = vld [vmem:[#allocation4 + $0xd8] sm:$0xff]
    %v512 = vld [vmem:[#allocation4 + $0xe0] sm:$0xff]
    %v513 = vld [vmem:[#allocation4 + $0xe8] sm:$0xff]
    %v514 = vld [vmem:[#allocation4 + $0xf0] sm:$0xff]
    %v515 = vld [vmem:[#allocation4 + $0xf8] sm:$0xff]
    %v516 = vld [vmem:[%s6] sm:$0x3]
    %v518 = vperm.slane %v516, 0
    %v519 = vperm.slane %v516, 1
    %v523 = vunpack.c.l.b16 %v190
    %v524 = vunpack.c.h.b16 %v190
    %v525 = vpack.c.b16 %v523, %v523
    %v526 = vpack.c.b16 %v524, %v524
    %v561 = vunpack.c.l.b16 %v484
    %v562 = vunpack.c.h.b16 %v484
    %v563 = vunpack.c.l.b16 %v485
    %v564 = vunpack.c.h.b16 %v485
    %v565 = vunpack.c.l.b16 %v486
    %v566 = vunpack.c.h.b16 %v486
    %v567 = vunpack.c.l.b16 %v487
    %v568 = vunpack.c.h.b16 %v487
    %v569 = vunpack.c.l.b16 %v488
    %v570 = vunpack.c.h.b16 %v488
    %v571 = vunpack.c.l.b16 %v489
    %v572 = vunpack.c.h.b16 %v489
    %v573 = vunpack.c.l.b16 %v490
    %v574 = vunpack.c.h.b16 %v490
    %v575 = vunpack.c.l.b16 %v491
    %v576 = vunpack.c.h.b16 %v491
    %v577 = vunpack.c.l.b16 %v492
    %v578 = vunpack.c.h.b16 %v492
    %v579 = vunpack.c.l.b16 %v493
    %v580 = vunpack.c.h.b16 %v493
    %v581 = vunpack.c.l.b16 %v494
    %v582 = vunpack.c.h.b16 %v494
    %v583 = vunpack.c.l.b16 %v495
    %v584 = vunpack.c.h.b16 %v495
    %v585 = vunpack.c.l.b16 %v496
    %v586 = vunpack.c.h.b16 %v496
    %v587 = vunpack.c.l.b16 %v497
    %v588 = vunpack.c.h.b16 %v497
    %v589 = vunpack.c.l.b16 %v498
    %v590 = vunpack.c.h.b16 %v498
    %v591 = vunpack.c.l.b16 %v499
    %v592 = vunpack.c.h.b16 %v499
    %v593 = vunpack.c.l.b16 %v500
    %v594 = vunpack.c.h.b16 %v500
    %v595 = vunpack.c.l.b16 %v501
    %v596 = vunpack.c.h.b16 %v501
    %v597 = vunpack.c.l.b16 %v502
    %v598 = vunpack.c.h.b16 %v502
    %v599 = vunpack.c.l.b16 %v503
    %v600 = vunpack.c.h.b16 %v503
    %v601 = vunpack.c.l.b16 %v504
    %v602 = vunpack.c.h.b16 %v504
    %v603 = vunpack.c.l.b16 %v505
    %v604 = vunpack.c.h.b16 %v505
    %v605 = vunpack.c.l.b16 %v506
    %v606 = vunpack.c.h.b16 %v506
    %v607 = vunpack.c.l.b16 %v507
    %v608 = vunpack.c.h.b16 %v507
    %v609 = vunpack.c.l.b16 %v508
    %v610 = vunpack.c.h.b16 %v508
    %v611 = vunpack.c.l.b16 %v509
    %v612 = vunpack.c.h.b16 %v509
    %v613 = vunpack.c.l.b16 %v510
    %v614 = vunpack.c.h.b16 %v510
    %v615 = vunpack.c.l.b16 %v511
    %v616 = vunpack.c.h.b16 %v511
    %v617 = vunpack.c.l.b16 %v512
    %v618 = vunpack.c.h.b16 %v512
    %v619 = vunpack.c.l.b16 %v513
    %v620 = vunpack.c.h.b16 %v513
    %v621 = vunpack.c.l.b16 %v514
    %v622 = vunpack.c.h.b16 %v514
    %v623 = vunpack.c.l.b16 %v515
    %v624 = vunpack.c.h.b16 %v515
    %v625 = vpack.c.b16 %v563, %v561
    %v626 = vpack.c.b16 %v564, %v562
    %v627 = vpack.c.b16 %v567, %v565
    %v628 = vpack.c.b16 %v568, %v566
    %v629 = vpack.c.b16 %v571, %v569
    %v630 = vpack.c.b16 %v572, %v570
    %v631 = vpack.c.b16 %v575, %v573
    %v632 = vpack.c.b16 %v576, %v574
    %v633 = vpack.c.b16 %v579, %v577
    %v634 = vpack.c.b16 %v580, %v578
    %v635 = vpack.c.b16 %v583, %v581
    %v636 = vpack.c.b16 %v584, %v582
    %v637 = vpack.c.b16 %v587, %v585
    %v638 = vpack.c.b16 %v588, %v586
    %v639 = vpack.c.b16 %v591, %v589
    %v640 = vpack.c.b16 %v592, %v590
    %v641 = vpack.c.b16 %v595, %v593
    %v642 = vpack.c.b16 %v596, %v594
    %v643 = vpack.c.b16 %v599, %v597
    %v644 = vpack.c.b16 %v600, %v598
    %v645 = vpack.c.b16 %v603, %v601
    %v646 = vpack.c.b16 %v604, %v602
    %v647 = vpack.c.b16 %v607, %v605
    %v648 = vpack.c.b16 %v608, %v606
    %v649 = vpack.c.b16 %v611, %v609
    %v650 = vpack.c.b16 %v612, %v610
    %v651 = vpack.c.b16 %v615, %v613
    %v652 = vpack.c.b16 %v616, %v614
    %v653 = vpack.c.b16 %v619, %v617
    %v654 = vpack.c.b16 %v620, %v618
    %v655 = vpack.c.b16 %v623, %v621
    %v656 = vpack.c.b16 %v624, %v622
    %689 = vmatpush.bf16.msra.mxu0 %v639
    %690 = vmatpush.bf16.msra.mxu0 %v637
    %691 = vmatpush.bf16.msra.mxu0 %v635
    %692 = vmatpush.bf16.msra.mxu0 %v633
    %693 = vmatpush.bf16.msra.mxu0 %v631
    %694 = vmatpush.bf16.msra.mxu0 %v629
    %695 = vmatpush.bf16.msra.mxu0 %v627
    %696 = vmatpush.bf16.msra.mxu0 %v625
    %697 = vmatmul.bf16.gmra.mxu0 %v525
    %v698 = vpop.f32.mrf.mxu0
    %v699 = vadd.f32 %v518, %v698
    %v700 = vpop.f32.mrf.mxu0
    %701 = vdwg.mxu0
    %702 = vmatpush.bf16.msra.mxu0 %v655
    %703 = vmatpush.bf16.msra.mxu0 %v653
    %704 = vmatpush.bf16.msra.mxu0 %v651
    %705 = vmatpush.bf16.msra.mxu0 %v649
    %706 = vmatpush.bf16.msra.mxu0 %v647
    %707 = vmatpush.bf16.msra.mxu0 %v645
    %708 = vmatpush.bf16.msra.mxu0 %v643
    %709 = vmatpush.bf16.msra.mxu0 %v641
    %710 = vmatmul.bf16.gmra.mxu0 %v526
    %v711 = vpop.f32.mrf.mxu0
    %v712 = vadd.f32 %v699, %v711
    %v713 = vpop.f32.mrf.mxu0
    %714 = vdwg.mxu0
    %715 = vmatpush.bf16.msra.mxu0 %v640
    %716 = vmatpush.bf16.msra.mxu0 %v638
    %717 = vmatpush.bf16.msra.mxu0 %v636
    %718 = vmatpush.bf16.msra.mxu0 %v634
    %719 = vmatpush.bf16.msra.mxu0 %v632
    %720 = vmatpush.bf16.msra.mxu0 %v630
    %721 = vmatpush.bf16.msra.mxu0 %v628
    %722 = vmatpush.bf16.msra.mxu0 %v626
    %723 = vmatmul.bf16.gmra.mxu0 %v525
    %v724 = vpop.f32.mrf.mxu0
    %v725 = vadd.f32 %v519, %v724
    %v726 = vpop.f32.mrf.mxu0
    %727 = vdwg.mxu0
    %728 = vmatpush.bf16.msra.mxu0 %v656
    %729 = vmatpush.bf16.msra.mxu0 %v654
    %730 = vmatpush.bf16.msra.mxu0 %v652
    %731 = vmatpush.bf16.msra.mxu0 %v650
    %732 = vmatpush.bf16.msra.mxu0 %v648
    %733 = vmatpush.bf16.msra.mxu0 %v646
    %734 = vmatpush.bf16.msra.mxu0 %v644
    %735 = vmatpush.bf16.msra.mxu0 %v642
    %736 = vmatmul.bf16.gmra.mxu0 %v526
    %v737 = vpop.f32.mrf.mxu0
    %v738 = vadd.f32 %v725, %v737
    %v739 = vpop.f32.mrf.mxu0
    %740 = vdwg.mxu0
    %v741 = vmax.f32 %v712, 0.0
    %v742 = vmax.f32 %v738, 0.0
    %v743 = vpack.c.bf16 %v741, %v741
    %v744 = vpack.c.bf16 %v742, %v742
    %v745 = vld [vmem:[%s8] sm:$0xf]
    %v746 = vld [vmem:[%s8 + $0x4] sm:$0xf]
    %v747 = vld [vmem:[%s8 + $0x8] sm:$0xf]
    %v748 = vld [vmem:[%s8 + $0xc] sm:$0xf]
    %v749 = vld [vmem:[%s8 + $0x10] sm:$0xf]
    %v750 = vld [vmem:[%s8 + $0x14] sm:$0xf]
    %v751 = vld [vmem:[%s8 + $0x18] sm:$0xf]
    %v752 = vld [vmem:[%s8 + $0x1c] sm:$0xf]
    %v753 = vld [vmem:[%s8 + $0x20] sm:$0xf]
    %v754 = vld [vmem:[%s8 + $0x24] sm:$0xf]
    %v755 = vld [vmem:[%s8 + $0x28] sm:$0xf]
    %v756 = vld [vmem:[%s8 + $0x2c] sm:$0xf]
    %v757 = vld [vmem:[%s8 + $0x30] sm:$0xf]
    %v758 = vld [vmem:[%s8 + $0x34] sm:$0xf]
    %v759 = vld [vmem:[%s8 + $0x38] sm:$0xf]
    %v760 = vld [vmem:[%s8 + $0x3c] sm:$0xf]
    %v761 = vld [vmem:[%s8 + $0x40] sm:$0xf]
    %v762 = vld [vmem:[%s8 + $0x44] sm:$0xf]
    %v763 = vld [vmem:[%s8 + $0x48] sm:$0xf]
    %v764 = vld [vmem:[%s8 + $0x4c] sm:$0xf]
    %v765 = vld [vmem:[%s8 + $0x50] sm:$0xf]
    %v766 = vld [vmem:[%s8 + $0x54] sm:$0xf]
    %v767 = vld [vmem:[%s8 + $0x58] sm:$0xf]
    %v768 = vld [vmem:[%s8 + $0x5c] sm:$0xf]
    %v769 = vld [vmem:[%s8 + $0x60] sm:$0xf]
    %v770 = vld [vmem:[%s8 + $0x64] sm:$0xf]
    %v771 = vld [vmem:[%s8 + $0x68] sm:$0xf]
    %v772 = vld [vmem:[%s8 + $0x6c] sm:$0xf]
    %v773 = vld [vmem:[%s8 + $0x70] sm:$0xf]
    %v774 = vld [vmem:[%s8 + $0x74] sm:$0xf]
    %v775 = vld [vmem:[%s8 + $0x78] sm:$0xf]
    %v776 = vld [vmem:[%s8 + $0x7c] sm:$0xf]
    %v809 = vunpack.c.l.b16 %v745
    %v810 = vunpack.c.l.b16 %v746
    %v811 = vunpack.c.l.b16 %v747
    %v812 = vunpack.c.l.b16 %v748
    %v813 = vunpack.c.l.b16 %v749
    %v814 = vunpack.c.l.b16 %v750
    %v815 = vunpack.c.l.b16 %v751
    %v816 = vunpack.c.l.b16 %v752
    %v817 = vunpack.c.l.b16 %v753
    %v818 = vunpack.c.l.b16 %v754
    %v819 = vunpack.c.l.b16 %v755
    %v820 = vunpack.c.l.b16 %v756
    %v821 = vunpack.c.l.b16 %v757
    %v822 = vunpack.c.l.b16 %v758
    %v823 = vunpack.c.l.b16 %v759
    %v824 = vunpack.c.l.b16 %v760
    %v825 = vunpack.c.l.b16 %v761
    %v826 = vunpack.c.l.b16 %v762
    %v827 = vunpack.c.l.b16 %v763
    %v828 = vunpack.c.l.b16 %v764
    %v829 = vunpack.c.l.b16 %v765
    %v830 = vunpack.c.l.b16 %v766
    %v831 = vunpack.c.l.b16 %v767
    %v832 = vunpack.c.l.b16 %v768
    %v833 = vunpack.c.l.b16 %v769
    %v834 = vunpack.c.l.b16 %v770
    %v835 = vunpack.c.l.b16 %v771
    %v836 = vunpack.c.l.b16 %v772
    %v837 = vunpack.c.l.b16 %v773
    %v838 = vunpack.c.l.b16 %v774
    %v839 = vunpack.c.l.b16 %v775
    %v840 = vunpack.c.l.b16 %v776
    %v841 = vpack.c.b16 %v810, %v809
    %v842 = vpack.c.b16 %v812, %v811
    %v843 = vpack.c.b16 %v814, %v813
    %v844 = vpack.c.b16 %v816, %v815
    %v845 = vpack.c.b16 %v818, %v817
    %v846 = vpack.c.b16 %v820, %v819
    %v847 = vpack.c.b16 %v822, %v821
    %v848 = vpack.c.b16 %v824, %v823
    %v849 = vpack.c.b16 %v826, %v825
    %v850 = vpack.c.b16 %v828, %v827
    %v851 = vpack.c.b16 %v830, %v829
    %v852 = vpack.c.b16 %v832, %v831
    %v853 = vpack.c.b16 %v834, %v833
    %v854 = vpack.c.b16 %v836, %v835
    %v855 = vpack.c.b16 %v838, %v837
    %v856 = vpack.c.b16 %v840, %v839
    %873 = vmatpush.bf16.msra.mxu0 %v848
    %874 = vmatpush.bf16.msra.mxu0 %v847
    %875 = vmatpush.bf16.msra.mxu0 %v846
    %876 = vmatpush.bf16.msra.mxu0 %v845
    %877 = vmatpush.bf16.msra.mxu0 %v844
    %878 = vmatpush.bf16.msra.mxu0 %v843
    %879 = vmatpush.bf16.msra.mxu0 %v842
    %880 = vmatpush.bf16.msra.mxu0 %v841
    %881 = vmatmul.bf16.gmra.mxu0 %v743
    %v882 = vpop.f32.mrf.mxu0
    %v883 = vadd.f32 0.0, %v882
    %v884 = vpop.f32.mrf.mxu0
    %885 = vdwg.mxu0
    %886 = vmatpush.bf16.msra.mxu0 %v856
    %887 = vmatpush.bf16.msra.mxu0 %v855
    %888 = vmatpush.bf16.msra.mxu0 %v854
    %889 = vmatpush.bf16.msra.mxu0 %v853
    %890 = vmatpush.bf16.msra.mxu0 %v852
    %891 = vmatpush.bf16.msra.mxu0 %v851
    %892 = vmatpush.bf16.msra.mxu0 %v850
    %893 = vmatpush.bf16.msra.mxu0 %v849
    %894 = vmatmul.bf16.gmra.mxu0 %v744
    %v895 = vpop.f32.mrf.mxu0
    %v896 = vadd.f32 %v883, %v895
    %v897 = vpop.f32.mrf.mxu0
    %898 = vdwg.mxu0
    %v931 = vunpack.c.l.b16 %v452
    %v932 = vunpack.c.l.b16 %v453
    %v933 = vunpack.c.l.b16 %v454
    %v934 = vunpack.c.l.b16 %v455
    %v935 = vunpack.c.l.b16 %v456
    %v936 = vunpack.c.l.b16 %v457
    %v937 = vunpack.c.l.b16 %v458
    %v938 = vunpack.c.l.b16 %v459
    %v939 = vunpack.c.l.b16 %v460
    %v940 = vunpack.c.l.b16 %v461
    %v941 = vunpack.c.l.b16 %v462
    %v942 = vunpack.c.l.b16 %v463
    %v943 = vunpack.c.l.b16 %v464
    %v944 = vunpack.c.l.b16 %v465
    %v945 = vunpack.c.l.b16 %v466
    %v946 = vunpack.c.l.b16 %v467
    %v947 = vunpack.c.l.b16 %v468
    %v948 = vunpack.c.l.b16 %v469
    %v949 = vunpack.c.l.b16 %v470
    %v950 = vunpack.c.l.b16 %v471
    %v951 = vunpack.c.l.b16 %v472
    %v952 = vunpack.c.l.b16 %v473
    %v953 = vunpack.c.l.b16 %v474
    %v954 = vunpack.c.l.b16 %v475
    %v955 = vunpack.c.l.b16 %v476
    %v956 = vunpack.c.l.b16 %v477
    %v957 = vunpack.c.l.b16 %v478
    %v958 = vunpack.c.l.b16 %v479
    %v959 = vunpack.c.l.b16 %v480
    %v960 = vunpack.c.l.b16 %v481
    %v961 = vunpack.c.l.b16 %v482
    %v962 = vunpack.c.l.b16 %v483
    %v963 = vpack.c.b16 %v932, %v931
    %v964 = vpack.c.b16 %v934, %v933
    %v965 = vpack.c.b16 %v936, %v935
    %v966 = vpack.c.b16 %v938, %v937
    %v967 = vpack.c.b16 %v940, %v939
    %v968 = vpack.c.b16 %v942, %v941
    %v969 = vpack.c.b16 %v944, %v943
    %v970 = vpack.c.b16 %v946, %v945
    %v971 = vpack.c.b16 %v948, %v947
    %v972 = vpack.c.b16 %v950, %v949
    %v973 = vpack.c.b16 %v952, %v951
    %v974 = vpack.c.b16 %v954, %v953
    %v975 = vpack.c.b16 %v956, %v955
    %v976 = vpack.c.b16 %v958, %v957
    %v977 = vpack.c.b16 %v960, %v959
    %v978 = vpack.c.b16 %v962, %v961
    %995 = vmatpush.bf16.msra.mxu0 %v970
    %996 = vmatpush.bf16.msra.mxu0 %v969
    %997 = vmatpush.bf16.msra.mxu0 %v968
    %998 = vmatpush.bf16.msra.mxu0 %v967
    %999 = vmatpush.bf16.msra.mxu0 %v966
    %1000 = vmatpush.bf16.msra.mxu0 %v965
    %1001 = vmatpush.bf16.msra.mxu0 %v964
    %1002 = vmatpush.bf16.msra.mxu0 %v963
    %1003 = vmatmul.bf16.gmra.mxu0 %v450
    %v1004 = vpop.f32.mrf.mxu0
    %v1005 = vadd.f32 %v896, %v1004
    %v1006 = vpop.f32.mrf.mxu0
    %1007 = vdwg.mxu0
    %1008 = vmatpush.bf16.msra.mxu0 %v978
    %1009 = vmatpush.bf16.msra.mxu0 %v977
    %1010 = vmatpush.bf16.msra.mxu0 %v976
    %1011 = vmatpush.bf16.msra.mxu0 %v975
    %1012 = vmatpush.bf16.msra.mxu0 %v974
    %1013 = vmatpush.bf16.msra.mxu0 %v973
    %1014 = vmatpush.bf16.msra.mxu0 %v972
    %1015 = vmatpush.bf16.msra.mxu0 %v971
    %1016 = vmatmul.bf16.gmra.mxu0 %v451
    %v1017 = vpop.f32.mrf.mxu0
    %v1018 = vadd.f32 %v1005, %v1017
    %v1019 = vpop.f32.mrf.mxu0
    %1020 = vdwg.mxu0
    %v1021 = vld [vmem:[%s9] sm:$0x1]
    %v1023 = vperm.slane %v1021, 0
    %v1025 = vadd.f32 %v1018, %v1023
    %vm1026 = vcmask 9216
    %1027 = vst.msk [vmem:[%s10] sm:$0x3] %vm1026, %v1025
    // Predicated region
    $region50: #{critic_forward.1} parent=1 // pred_check
      _
    $region51: #{critic_forward.1} parent=1 // pred_check_branch
      %1029 = sbr.rel (0) target = $region53
    $region52: #{critic_forward.1} parent=1 // pred_region
      _
    $region53: #{critic_forward.1} parent=1 // pred_fallthru
      _
    // Predicated region
    $region54: #{critic_forward.1} parent=1 // pred_check
      _
    $region55: #{critic_forward.1} parent=1 // pred_check_branch
      %1031 = sbr.rel (0) target = $region57
    $region56: #{critic_forward.1} parent=1 // pred_region
      _
    $region57: #{critic_forward.1} parent=1 // pred_fallthru
      _
    %1032 = vsyncpa [#allocation3], 1
    %1033 = vsyncpa [#allocation5], 1

</llo_original>
